<compile_context>
chip_gen: v5e
topology: v5e:2x2
jax: 0.10.0
libtpu: 0.0.40
codegen_flags: <defaults>
</compile_context>

<pallas_src>
import numpy as np
import jax
import jax.numpy as jnp
from jax.experimental import pallas as pl
from jax.experimental.pallas import tpu as pltpu

# ---- module hyper-parameters (small, consistent with the forward) --------------------
VOCAB = 32          # vocab_size
EMBED = 16          # embedding_dim
CONV_OUT = 32       # Conv1d out_channels
KSIZE = 3           # Conv1d kernel_size (stride=1, padding=1)
NUM_CLASSES = 2     # Linear out_features
SEQ = 8             # tokens per sentence
BATCH = 2           # sentences per batch
ROWS = BATCH * SEQ  # batch folded into the row (sublane) dimension

_HI = jax.lax.Precision.HIGHEST   # explicit, per-dot; K is tiny so multi-pass cost is negligible


# ---------------------------------- Pallas kernel -------------------------------------
def sentiment_cnn_kernel(ids_ref, wconv_ref, bconv_ref, wfc_ref, bfc_ref, out_ref):
    ids = ids_ref[...]                                                    # (ROWS, 1) int32
    pos = jax.lax.broadcasted_iota(jnp.int32, (ROWS, 1), 0) % SEQ         # position within sentence

    # Shifted ids (previous / next token of the same sentence); -1 sentinel == zero padding.
    pad = jnp.full((1, 1), -1, jnp.int32)
    ids_prev = jnp.where(pos == 0, -1, jnp.concatenate([pad, ids[:-1, :]], axis=0))
    ids_next = jnp.where(pos == SEQ - 1, -1, jnp.concatenate([ids[1:, :], pad], axis=0))

    # (ROWS, 3*VOCAB) one-hot for the three conv taps; sentinel rows are all-zero (zero padding).
    viota = jax.lax.broadcasted_iota(jnp.int32, (ROWS, VOCAB), 1)
    onehot3 = jnp.concatenate([(viota == ids_prev).astype(jnp.float32),
                               (viota == ids).astype(jnp.float32),
                               (viota == ids_next).astype(jnp.float32)], axis=1)

    # Fused embedding + Conv1d(k=3, padding=1) + bias + ReLU: ONE MXU matmul.
    conv = jnp.dot(onehot3, wconv_ref[...],
                   preferred_element_type=jnp.float32, precision=_HI) + bconv_ref[...]
    conv = jnp.maximum(conv, 0.0)                                         # (ROWS, CONV_OUT)

    # Global max-pool over the sequence per batch element (sublane-aligned 8-row slices).
    pooled = jnp.concatenate(
        [jnp.max(conv[b * SEQ:(b + 1) * SEQ, :], axis=0, keepdims=True) for b in range(BATCH)],
        axis=0)                                                           # (BATCH, CONV_OUT)

    # Final classifier.
    out_ref[...] = (jnp.dot(pooled, wfc_ref[...],
                            preferred_element_type=jnp.float32, precision=_HI)
                    + bfc_ref[...]).astype(out_ref.dtype)


# ------------------------------- parameter construction -------------------------------
def init_torch_params(key):
    """Deterministic params in PyTorch layouts (Conv1d weight = (out, in, k); Linear = (out, in))."""
    keys = iter(jax.random.split(key, 5))
    rnd = lambda shape, s: jax.random.normal(next(keys), shape, jnp.float32) * s
    return dict(
        emb=rnd((VOCAB, EMBED), 1.0),                 # nn.Embedding default ~ N(0, 1)
        conv_w=rnd((CONV_OUT, EMBED, KSIZE), 0.1),
        conv_b=rnd((CONV_OUT,), 0.1),
        fc_w=rnd((NUM_CLASSES, CONV_OUT), 0.1),
        fc_b=rnd((NUM_CLASSES,), 0.1),
    )


def pack_kernel_params(p):
    """Pre-fold the embedding table into each conv tap (one-off, host side).

    Tap k of PyTorch's Conv1d (padding=1) multiplies x[t + k - 1]; stacking (emb @ Wk^T) over k
    gives a (3*VOCAB, CONV_OUT) weight so embedding lookup + conv become one one-hot matmul.
    """
    wconv = jnp.concatenate(
        [jnp.dot(p["emb"], p["conv_w"][:, :, k].T, precision=_HI) for k in range(KSIZE)],
        axis=0)                                         # (3*VOCAB, CONV_OUT)
    return dict(
        wconv=wconv,
        bconv=p["conv_b"].reshape(1, CONV_OUT),
        wfc=p["fc_w"].T,                                # (CONV_OUT, NUM_CLASSES)
        bfc=p["fc_b"].reshape(1, NUM_CLASSES),
    )


ARG_ORDER = ["wconv", "bconv", "wfc", "bfc"]


@jax.jit
def sentiment_cnn_forward(token_ids, kp):
    # wrapper glue only: (batch, seq) int ids -> (batch*seq, 1) rows for the kernel
    ids = token_ids.reshape(ROWS, 1).astype(jnp.int32)
    args = (ids,) + tuple(kp[n] for n in ARG_ORDER)
    return pl.pallas_call(
        sentiment_cnn_kernel,
        out_shape=jax.ShapeDtypeStruct((BATCH, NUM_CLASSES), jnp.float32),
        in_specs=[pl.BlockSpec(memory_space=pltpu.MemorySpace.VMEM)] * len(args),
        out_specs=pl.BlockSpec(memory_space=pltpu.MemorySpace.VMEM),
    )(*args)


# ------------------------------- pure-JAX reference -----------------------------------
def reference_forward(token_ids, p):
    emb = p["emb"][token_ids]                               # (B, S, E)  == self.embedding(text)
    x = jnp.transpose(emb, (0, 2, 1))                       # (B, E, S)  == .permute(0, 2, 1)
    conv = jax.lax.conv_general_dilated(
        x, p["conv_w"], window_strides=(1,), padding=[(1, 1)],
        dimension_numbers=("NCW", "OIW", "NCW"), precision=_HI)
    conv = jnp.maximum(conv + p["conv_b"][None, :, None], 0.0)   # F.relu(self.conv(...))
    pooled = jnp.max(conv, axis=2)                          # F.max_pool1d(., S).squeeze(2)
    return jnp.dot(pooled, p["fc_w"].T, precision=_HI) + p["fc_b"]


if __name__ == "__main__":
    root = jax.random.PRNGKey(0)
    pkey, xkey = jax.random.split(root)
    params = init_torch_params(pkey)
    kp = pack_kernel_params(params)

    token_ids = jax.random.randint(xkey, (BATCH, SEQ), 0, VOCAB, dtype=jnp.int32)  # `text`

    out = sentiment_cnn_forward(token_ids, kp)
    out = jax.block_until_ready(out)

    ref = reference_forward(token_ids, params)
    np.testing.assert_allclose(np.asarray(out), np.asarray(ref), rtol=1e-4, atol=1e-4)
    print("KERNEL_OK")
</pallas_src>

<mosaic_0001>
module attributes {stable_mosaic.version = 11 : i64} {
  func.func @sentiment_cnn_kernel(%arg0: memref<16x1xi32, #tpu.memory_space<vmem>>, %arg1: memref<96x32xf32, #tpu.memory_space<vmem>>, %arg2: memref<1x32xf32, #tpu.memory_space<vmem>>, %arg3: memref<32x2xf32, #tpu.memory_space<vmem>>, %arg4: memref<1x2xf32, #tpu.memory_space<vmem>>, %arg5: memref<2x2xf32, #tpu.memory_space<vmem>>) attributes {dimension_semantics = [], scalar_prefetch = 0 : i64, scratch_operands = 0 : i64, tpu.core_type = #tpu.core_type<tc>} {
    %c0 = arith.constant 0 : index
    %c0_0 = arith.constant 0 : index
    %0 = vector.load %arg0[%c0, %c0_0] : memref<16x1xi32, #tpu.memory_space<vmem>>, vector<16x1xi32>
    %1 = tpu.iota {dimensions = array<i32: 0>} : vector<16x1xi32>
    %c8_i32 = arith.constant 8 : i32
    %c0_i32 = arith.constant 0 : i32
    %2 = arith.cmpi eq, %c8_i32, %c0_i32 : i32
    %c1_i32 = arith.constant 1 : i32
    %3 = arith.select %2, %c1_i32, %c8_i32 : i32
    %4 = vector.broadcast %3 : i32 to vector<16x1xi32>
    %5 = arith.remsi %1, %4 : vector<16x1xi32>
    %c0_i32_1 = arith.constant 0 : i32
    %6 = vector.broadcast %c0_i32_1 : i32 to vector<16x1xi32>
    %7 = arith.cmpi ne, %5, %6 : vector<16x1xi32>
    %c0_i32_2 = arith.constant 0 : i32
    %8 = vector.broadcast %c0_i32_2 : i32 to vector<16x1xi32>
    %9 = arith.cmpi slt, %5, %8 : vector<16x1xi32>
    %c0_i32_3 = arith.constant 0 : i32
    %10 = arith.cmpi slt, %3, %c0_i32_3 : i32
    %11 = vector.broadcast %10 : i1 to vector<16x1xi1>
    %12 = vector.broadcast %11 : vector<16x1xi1> to vector<16x1xi1>
    %13 = arith.xori %9, %12 : vector<16x1xi1>
    %14 = arith.andi %13, %7 : vector<16x1xi1>
    %15 = vector.broadcast %3 : i32 to vector<16x1xi32>
    %16 = arith.addi %5, %15 : vector<16x1xi32>
    %17 = arith.select %14, %16, %5 : vector<16x1xi1>, vector<16x1xi32>
    %c-1_i32 = arith.constant -1 : i32
    %18 = vector.broadcast %c-1_i32 : i32 to vector<1x1xi32>
    %c0_i32_4 = arith.constant 0 : i32
    %19 = vector.broadcast %c0_i32_4 : i32 to vector<16x1xi32>
    %20 = arith.cmpi eq, %17, %19 : vector<16x1xi32>
    %21 = vector.extract_strided_slice %0 {offsets = [0, 0], sizes = [15, 1], strides = [1, 1]} : vector<16x1xi32> to vector<15x1xi32>
    %22 = tpu.concatenate %18, %21 in 0 : vector<1x1xi32>, vector<15x1xi32> -> vector<16x1xi32>
    %c-1_i32_5 = arith.constant -1 : i32
    %23 = vector.broadcast %c-1_i32_5 : i32 to vector<16x1xi32>
    %24 = arith.select %20, %23, %22 : vector<16x1xi1>, vector<16x1xi32>
    %c7_i32 = arith.constant 7 : i32
    %25 = vector.broadcast %c7_i32 : i32 to vector<16x1xi32>
    %26 = arith.cmpi eq, %17, %25 : vector<16x1xi32>
    %27 = vector.extract_strided_slice %0 {offsets = [1, 0], sizes = [15, 1], strides = [1, 1]} : vector<16x1xi32> to vector<15x1xi32>
    %28 = tpu.concatenate %27, %18 in 0 : vector<15x1xi32>, vector<1x1xi32> -> vector<16x1xi32>
    %c-1_i32_6 = arith.constant -1 : i32
    %29 = vector.broadcast %c-1_i32_6 : i32 to vector<16x1xi32>
    %30 = arith.select %26, %29, %28 : vector<16x1xi1>, vector<16x1xi32>
    %31 = tpu.iota {dimensions = array<i32: 1>} : vector<16x32xi32>
    %32 = vector.broadcast %24 : vector<16x1xi32> to vector<16x32xi32>
    %33 = arith.cmpi eq, %31, %32 : vector<16x32xi32>
    %34 = arith.extui %33 : vector<16x32xi1> to vector<16x32xi32>
    %35 = arith.sitofp %34 : vector<16x32xi32> to vector<16x32xf32>
    %36 = vector.broadcast %0 : vector<16x1xi32> to vector<16x32xi32>
    %37 = arith.cmpi eq, %31, %36 : vector<16x32xi32>
    %38 = arith.extui %37 : vector<16x32xi1> to vector<16x32xi32>
    %39 = arith.sitofp %38 : vector<16x32xi32> to vector<16x32xf32>
    %40 = vector.broadcast %30 : vector<16x1xi32> to vector<16x32xi32>
    %41 = arith.cmpi eq, %31, %40 : vector<16x32xi32>
    %42 = arith.extui %41 : vector<16x32xi1> to vector<16x32xi32>
    %43 = arith.sitofp %42 : vector<16x32xi32> to vector<16x32xf32>
    %44 = tpu.concatenate %35, %39, %43 in 1 : vector<16x32xf32>, vector<16x32xf32>, vector<16x32xf32> -> vector<16x96xf32>
    %c0_7 = arith.constant 0 : index
    %c0_8 = arith.constant 0 : index
    %45 = vector.load %arg1[%c0_7, %c0_8] : memref<96x32xf32, #tpu.memory_space<vmem>>, vector<96x32xf32>
    %cst = arith.constant dense<0.000000e+00> : vector<16x32xf32>
    %46 = tpu.matmul %44, %45, %cst {dimension_numbers = #tpu.dot_dimension_numbers<[1], [0], [0], [1], [0, 0, 1, 1], [], []>, precision = #tpu.contract_precision<fp32>} : vector<16x96xf32>, vector<96x32xf32>, vector<16x32xf32> -> vector<16x32xf32>
    %c0_9 = arith.constant 0 : index
    %c0_10 = arith.constant 0 : index
    %47 = vector.load %arg2[%c0_9, %c0_10] : memref<1x32xf32, #tpu.memory_space<vmem>>, vector<1x32xf32>
    %48 = vector.broadcast %47 : vector<1x32xf32> to vector<16x32xf32>
    %49 = arith.addf %46, %48 : vector<16x32xf32>
    %cst_11 = arith.constant 0.000000e+00 : f32
    %50 = vector.broadcast %cst_11 : f32 to vector<16x32xf32>
    %51 = arith.maximumf %49, %50 : vector<16x32xf32>
    %52 = vector.extract_strided_slice %51 {offsets = [0, 0], sizes = [8, 32], strides = [1, 1]} : vector<16x32xf32> to vector<8x32xf32>
    %cst_12 = arith.constant dense<0xFF800000> : vector<32xf32>
    %53 = vector.multi_reduction <maximumf>, %52, %cst_12 [0] : vector<8x32xf32> to vector<32xf32>
    %54 = vector.shape_cast %53 : vector<32xf32> to vector<1x32xf32>
    %55 = vector.extract_strided_slice %51 {offsets = [8, 0], sizes = [8, 32], strides = [1, 1]} : vector<16x32xf32> to vector<8x32xf32>
    %cst_13 = arith.constant dense<0xFF800000> : vector<32xf32>
    %56 = vector.multi_reduction <maximumf>, %55, %cst_13 [0] : vector<8x32xf32> to vector<32xf32>
    %57 = vector.shape_cast %56 : vector<32xf32> to vector<1x32xf32>
    %58 = tpu.concatenate %54, %57 in 0 : vector<1x32xf32>, vector<1x32xf32> -> vector<2x32xf32>
    %c0_14 = arith.constant 0 : index
    %c0_15 = arith.constant 0 : index
    %59 = vector.load %arg3[%c0_14, %c0_15] : memref<32x2xf32, #tpu.memory_space<vmem>>, vector<32x2xf32>
    %cst_16 = arith.constant dense<0.000000e+00> : vector<2x2xf32>
    %60 = tpu.matmul %58, %59, %cst_16 {dimension_numbers = #tpu.dot_dimension_numbers<[1], [0], [0], [1], [0, 0, 1, 1], [], []>, precision = #tpu.contract_precision<fp32>} : vector<2x32xf32>, vector<32x2xf32>, vector<2x2xf32> -> vector<2x2xf32>
    %c0_17 = arith.constant 0 : index
    %c0_18 = arith.constant 0 : index
    %61 = vector.load %arg4[%c0_17, %c0_18] : memref<1x2xf32, #tpu.memory_space<vmem>>, vector<1x2xf32>
    %62 = vector.broadcast %61 : vector<1x2xf32> to vector<2x2xf32>
    %63 = arith.addf %60, %62 : vector<2x2xf32>
    %c0_19 = arith.constant 0 : index
    %c0_20 = arith.constant 0 : index
    %64 = vector.load %arg5[%c0_19, %c0_20] : memref<2x2xf32, #tpu.memory_space<vmem>>, vector<2x2xf32>
    tpu.vector_store %arg5[%c0_19, %c0_20], %63 {strides = array<i32>} : memref<2x2xf32, #tpu.memory_space<vmem>>, vector<2x2xf32>,
    return
  }
}

</mosaic_0001>

<llo_original>
// kernel: sentiment_cnn_forward.1
$region0: #{sentiment_cnn_forward.1}
  #allocation0 [shape = 'u32[]', space=smem, size = 0x4, offset = 0x4, fixed_abs, tag = 'smem constant byte address 0x4 - core index']
  #allocation1 [shape = 'u32[72,128]{1,0:T(1,128)}', space=vmem, size = 0x9000, scoped, tag = 'internal scratch']
  %s0 = inlined_call_operand.vmem [shape: s32[16,1], index: 0, kind: input, shape index: {}]
  %s1 = inlined_call_operand.vmem [shape: f32[96,32], index: 1, kind: input, shape index: {}]
  %s2 = inlined_call_operand.vmem [shape: f32[1,32], index: 2, kind: input, shape index: {}]
  %s3 = inlined_call_operand.vmem [shape: f32[32,2], index: 3, kind: input, shape index: {}]
  %s4 = inlined_call_operand.vmem [shape: f32[1,2], index: 4, kind: input, shape index: {}]
  %s5 = inlined_call_operand.hbm [shape: f32[2,2], index: 5, kind: output, shape index: {}]
  %s6 = sld [smem:[#allocation0]]
  $region30: #{sentiment_cnn_forward.1} parent=0
    _
  %s8 = ssub.s32 1, %s6
  %s9 = scalar_select 0, %s8, %s6
  $region1: #{sentiment_cnn_forward.1} parent=0
    #allocation2 [shape = 'u8[1024]{0}', space=vmem, size = 0x400, scoped, tag = 'output window, operand 0, single buffered']
    #allocation3 [shape = 's32[1]{0}', space=sflag, size = 0x4, scoped, tag = 'scoped memory for sentiment_cnn_forward.1']
    %10 = vsyncpa [#allocation3], 0
    // Predicated region
    $region2: #{sentiment_cnn_forward.1} parent=1 // pred_check
      _
    $region3: #{sentiment_cnn_forward.1} parent=1 // pred_check_branch
      %12 = sbr.rel (0) target = $region5
    $region4: #{sentiment_cnn_forward.1} parent=1 // pred_region
      _
    $region5: #{sentiment_cnn_forward.1} parent=1 // pred_fallthru
      _
    // Predicated region
    $region6: #{sentiment_cnn_forward.1} parent=1 // pred_check
      _
    $region7: #{sentiment_cnn_forward.1} parent=1 // pred_check_branch
      %14 = sbr.rel (0) target = $region9
    $region8: #{sentiment_cnn_forward.1} parent=1 // pred_region
      _
    $region9: #{sentiment_cnn_forward.1} parent=1 // pred_fallthru
      _
    // Predicated region
    $region10: #{sentiment_cnn_forward.1} parent=1 // pred_check
      _
    $region11: #{sentiment_cnn_forward.1} parent=1 // pred_check_branch
      %16 = sbr.rel (0) target = $region13
    $region12: #{sentiment_cnn_forward.1} parent=1 // pred_region
      _
    $region13: #{sentiment_cnn_forward.1} parent=1 // pred_fallthru
      _
    // Predicated region
    $region14: #{sentiment_cnn_forward.1} parent=1 // pred_check
      _
    $region15: #{sentiment_cnn_forward.1} parent=1 // pred_check_branch
      %18 = sbr.rel (0) target = $region17
    $region16: #{sentiment_cnn_forward.1} parent=1 // pred_region
      _
    $region17: #{sentiment_cnn_forward.1} parent=1 // pred_fallthru
      _
    // Predicated region
    $region18: #{sentiment_cnn_forward.1} parent=1 // pred_check
      _
    $region19: #{sentiment_cnn_forward.1} parent=1 // pred_check_branch
      %20 = sbr.rel (0) target = $region21
    $region20: #{sentiment_cnn_forward.1} parent=1 // pred_region
      _
    $region21: #{sentiment_cnn_forward.1} parent=1 // pred_fallthru
      _
    %v21 = vld [vmem:[%s0] sm:$0xff]
    %v22 = vld [vmem:[%s0 + $0x8] sm:$0xff]
    %v23 = vlaneseq
    %v24 = vshrl.u32 %v23, 7
    %v25 = vadd.s32 %v24, 8
    %vm26 = vcmp.lt.s32.totalorder %v24, 0
    %v27 = vsub.s32 0, %v24
    %v28 = vsel %vm26, %v27, %v24
    %v29 = vshrl.u32 %v28, 3
    %v30 = vand.u32 %v28, 7
    %v31 = vsub.s32 0, %v30
    %v32 = vsel %vm26, %v31, %v30
    %vm33 = vcmp.lt.s32.totalorder %v25, 0
    %v34 = vsub.s32 0, %v25
    %v35 = vsel %vm33, %v34, %v25
    %v36 = vshrl.u32 %v35, 3
    %v37 = vand.u32 %v35, 7
    %v38 = vsub.s32 0, %v37
    %v39 = vsel %vm33, %v38, %v37
    %vm40 = vcmp.ne.s32.totalorder %v32, 0
    %vm41 = vcmp.ne.s32.totalorder %v39, 0
    %vm42 = vcmp.lt.s32.totalorder %v32, 0
    %vm43 = vcmp.lt.s32.totalorder %v39, 0
    %vm44 = vmand %vm42, %vm40
    %vm45 = vmand %vm43, %vm41
    %v46 = vadd.s32 %v32, 8
    %v47 = vadd.s32 %v39, 8
    %v48 = vsel %vm44, %v46, %v32
    %v49 = vsel %vm45, %v47, %v39
    %vm50 = vcmp.eq.s32.totalorder %v48, 0
    %vm51 = vcmp.eq.s32.totalorder %v49, 0
    %vm52 = vcmask 1040384
    %v53 = vrot.slane %v21, 7
    %v54 = vrot.slane %v22, 7
    %v55 = vsel %vm52, %v53, %v54
    %v56 = vsel %vm52, 4294967295, %v53
    %v57 = vsel %vm50, 4294967295, %v56
    %v58 = vsel %vm51, 4294967295, %v55
    %vm59 = vcmp.eq.s32.totalorder %v48, 7
    %vm60 = vcmp.eq.s32.totalorder %v49, 7
    %vm61 = vcmask 1046528
    %v62 = vrot.slane %v21, 1
    %v63 = vrot.slane %v22, 1
    %v64 = vsel %vm61, %v62, %v63
    %v65 = vsel %vm61, %v63, 4294967295
    %v66 = vsel %vm59, 4294967295, %v64
    %v67 = vsel %vm60, 4294967295, %v65
    %v68 = vlaneseq
    %v69 = vand.u32 %v68, 127
    %70 = vset.pattern.permute.xlu0 0
    %71 = vperm.xlu0 %70, %v57
    %v72 = vpop.permute.xlu0 %71
    %73 = vset.pattern.permute.xlu0 0
    %74 = vperm.xlu0 %73, %v58
    %v75 = vpop.permute.xlu0 %74
    %vm76 = vcmp.eq.s32.totalorder %v69, %v72
    %vm77 = vcmp.eq.s32.totalorder %v69, %v75
    %v78 = vsel %vm76, 1, 0
    %v79 = vsel %vm77, 1, 0
    %v80 = vcvt.s32.f32 %v78
    %v81 = vcvt.s32.f32 %v79
    %82 = vset.pattern.permute.xlu0 0
    %83 = vperm.xlu0 %82, %v21
    %v84 = vpop.permute.xlu0 %83
    %85 = vset.pattern.permute.xlu0 0
    %86 = vperm.xlu0 %85, %v22
    %v87 = vpop.permute.xlu0 %86
    %vm88 = vcmp.eq.s32.totalorder %v69, %v84
    %vm89 = vcmp.eq.s32.totalorder %v69, %v87
    %v90 = vsel %vm88, 1, 0
    %v91 = vsel %vm89, 1, 0
    %v92 = vcvt.s32.f32 %v90
    %v93 = vcvt.s32.f32 %v91
    %94 = vset.pattern.permute.xlu0 0
    %95 = vperm.xlu0 %94, %v66
    %v96 = vpop.permute.xlu0 %95
    %97 = vset.pattern.permute.xlu0 0
    %98 = vperm.xlu0 %97, %v67
    %v99 = vpop.permute.xlu0 %98
    %vm100 = vcmp.eq.s32.totalorder %v69, %v96
    %vm101 = vcmp.eq.s32.totalorder %v69, %v99
    %v102 = vsel %vm100, 1, 0
    %v103 = vsel %vm101, 1, 0
    %v104 = vcvt.s32.f32 %v102
    %v105 = vcvt.s32.f32 %v103
    %108 = vrot.lane.b32.xlu0 %v92, 32
    %v109 = vpop.permute.xlu0 %108
    %110 = vrot.lane.b32.xlu0 %v93, 32
    %v111 = vpop.permute.xlu0 %110
    %116 = vrot.lane.b32.xlu0 %v104, 64
    %v117 = vpop.permute.xlu0 %116
    %118 = vrot.lane.b32.xlu0 %v105, 64
    %v119 = vpop.permute.xlu0 %118
    %vm122 = vcmask 261120
    %v123 = vsel %vm122, %v80, %v109
    %v124 = vsel %vm122, %v81, %v111
    %vm125 = vcmask 523264
    %v126 = vsel %vm125, %v123, %v117
    %v127 = vsel %vm125, %v124, %v119
    %v128 = vld [vmem:[%s1] sm:$0xff]
    %v129 = vld [vmem:[%s1 + $0x8] sm:$0xff]
    %v130 = vld [vmem:[%s1 + $0x10] sm:$0xff]
    %v131 = vld [vmem:[%s1 + $0x18] sm:$0xff]
    %v132 = vld [vmem:[%s1 + $0x20] sm:$0xff]
    %v133 = vld [vmem:[%s1 + $0x28] sm:$0xff]
    %v134 = vld [vmem:[%s1 + $0x30] sm:$0xff]
    %v135 = vld [vmem:[%s1 + $0x38] sm:$0xff]
    %v136 = vld [vmem:[%s1 + $0x40] sm:$0xff]
    %v137 = vld [vmem:[%s1 + $0x48] sm:$0xff]
    %v138 = vld [vmem:[%s1 + $0x50] sm:$0xff]
    %v139 = vld [vmem:[%s1 + $0x58] sm:$0xff]
    %v140 = vld [vmem:[%s2] sm:$0x1]
    %v142 = vperm.slane %v140, 0
    %vm144 = vcmask 785408
    %v146 = vsel %vm144, %v126, 0
    %v149 = vsel %vm144, %v127, 0
    %151 = vmatpush.msra.mxu0 0.0
    %152 = vmatpush.msra.mxu0 0.0
    %153 = vmatpush.msra.mxu0 0.0
    %154 = vmatpush.msra.mxu0 0.0
    %v155 = vand.u32 %v139, 4294901760
    %156 = vmatpush.msra.mxu0 %v155
    %v157 = vand.u32 %v138, 4294901760
    %158 = vmatpush.msra.mxu0 %v157
    %v159 = vand.u32 %v137, 4294901760
    %160 = vmatpush.msra.mxu0 %v159
    %v161 = vand.u32 %v136, 4294901760
    %162 = vmatpush.msra.mxu0 %v161
    %v163 = vand.u32 %v135, 4294901760
    %164 = vmatpush.msra.mxu0 %v163
    %v165 = vand.u32 %v134, 4294901760
    %166 = vmatpush.msra.mxu0 %v165
    %v167 = vand.u32 %v133, 4294901760
    %168 = vmatpush.msra.mxu0 %v167
    %v169 = vand.u32 %v132, 4294901760
    %170 = vmatpush.msra.mxu0 %v169
    %v171 = vand.u32 %v131, 4294901760
    %172 = vmatpush.msra.mxu0 %v171
    %v173 = vand.u32 %v130, 4294901760
    %174 = vmatpush.msra.mxu0 %v173
    %v175 = vand.u32 %v129, 4294901760
    %176 = vmatpush.msra.mxu0 %v175
    %v177 = vand.u32 %v128, 4294901760
    %178 = vmatpush.msra.mxu0 %v177
    %v179 = vand.u32 %v146, 4294901760
    %v180 = vsub.f32 %v146, %v179
    %v181 = vand.u32 %v180, 4294901760
    %v182 = vsub.f32 %v180, %v181
    %v183 = vand.u32 %v182, 4294901760
    %184 = vmatmul.f32.gmra.mxu0 %v183
    %v185 = vpop.f32.mrf.mxu0
    %v186 = vadd.f32 %v142, %v185
    %v187 = vand.u32 %v149, 4294901760
    %v188 = vsub.f32 %v149, %v187
    %v189 = vand.u32 %v188, 4294901760
    %v190 = vsub.f32 %v188, %v189
    %v191 = vand.u32 %v190, 4294901760
    %192 = vmatmul.f32.gmra.mxu0 %v191
    %v193 = vpop.f32.mrf.mxu0
    %v194 = vadd.f32 %v142, %v193
    %195 = vdwg.mxu0
    %196 = vmatpush.msra.mxu0 0.0
    %197 = vmatpush.msra.mxu0 0.0
    %198 = vmatpush.msra.mxu0 0.0
    %199 = vmatpush.msra.mxu0 0.0
    %v200 = vand.u32 %v139, 4294901760
    %v201 = vsub.f32 %v139, %v200
    %v202 = vand.u32 %v201, 4294901760
    %v203 = vsub.f32 %v201, %v202
    %v204 = vand.u32 %v203, 4294901760
    %205 = vmatpush.msra.mxu0 %v204
    %v206 = vand.u32 %v138, 4294901760
    %v207 = vsub.f32 %v138, %v206
    %v208 = vand.u32 %v207, 4294901760
    %v209 = vsub.f32 %v207, %v208
    %v210 = vand.u32 %v209, 4294901760
    %211 = vmatpush.msra.mxu0 %v210
    %v212 = vand.u32 %v137, 4294901760
    %v213 = vsub.f32 %v137, %v212
    %v214 = vand.u32 %v213, 4294901760
    %v215 = vsub.f32 %v213, %v214
    %v216 = vand.u32 %v215, 4294901760
    %217 = vmatpush.msra.mxu0 %v216
    %v218 = vand.u32 %v136, 4294901760
    %v219 = vsub.f32 %v136, %v218
    %v220 = vand.u32 %v219, 4294901760
    %v221 = vsub.f32 %v219, %v220
    %v222 = vand.u32 %v221, 4294901760
    %223 = vmatpush.msra.mxu0 %v222
    %v224 = vand.u32 %v135, 4294901760
    %v225 = vsub.f32 %v135, %v224
    %v226 = vand.u32 %v225, 4294901760
    %v227 = vsub.f32 %v225, %v226
    %v228 = vand.u32 %v227, 4294901760
    %229 = vmatpush.msra.mxu0 %v228
    %v230 = vand.u32 %v134, 4294901760
    %v231 = vsub.f32 %v134, %v230
    %v232 = vand.u32 %v231, 4294901760
    %v233 = vsub.f32 %v231, %v232
    %v234 = vand.u32 %v233, 4294901760
    %235 = vmatpush.msra.mxu0 %v234
    %v236 = vand.u32 %v133, 4294901760
    %v237 = vsub.f32 %v133, %v236
    %v238 = vand.u32 %v237, 4294901760
    %v239 = vsub.f32 %v237, %v238
    %v240 = vand.u32 %v239, 4294901760
    %241 = vmatpush.msra.mxu0 %v240
    %v242 = vand.u32 %v132, 4294901760
    %v243 = vsub.f32 %v132, %v242
    %v244 = vand.u32 %v243, 4294901760
    %v245 = vsub.f32 %v243, %v244
    %v246 = vand.u32 %v245, 4294901760
    %247 = vmatpush.msra.mxu0 %v246
    %v248 = vand.u32 %v131, 4294901760
    %v249 = vsub.f32 %v131, %v248
    %v250 = vand.u32 %v249, 4294901760
    %v251 = vsub.f32 %v249, %v250
    %v252 = vand.u32 %v251, 4294901760
    %253 = vmatpush.msra.mxu0 %v252
    %v254 = vand.u32 %v130, 4294901760
    %v255 = vsub.f32 %v130, %v254
    %v256 = vand.u32 %v255, 4294901760
    %v257 = vsub.f32 %v255, %v256
    %v258 = vand.u32 %v257, 4294901760
    %259 = vmatpush.msra.mxu0 %v258
    %v260 = vand.u32 %v129, 4294901760
    %v261 = vsub.f32 %v129, %v260
    %v262 = vand.u32 %v261, 4294901760
    %v263 = vsub.f32 %v261, %v262
    %v264 = vand.u32 %v263, 4294901760
    %265 = vmatpush.msra.mxu0 %v264
    %v266 = vand.u32 %v128, 4294901760
    %v267 = vsub.f32 %v128, %v266
    %v268 = vand.u32 %v267, 4294901760
    %v269 = vsub.f32 %v267, %v268
    %v270 = vand.u32 %v269, 4294901760
    %271 = vmatpush.msra.mxu0 %v270
    %v272 = vand.u32 %v146, 4294901760
    %273 = vmatmul.f32.gmra.mxu0 %v272
    %v274 = vpop.f32.mrf.mxu0
    %v275 = vadd.f32 %v186, %v274
    %v276 = vand.u32 %v149, 4294901760
    %277 = vmatmul.f32.gmra.mxu0 %v276
    %v278 = vpop.f32.mrf.mxu0
    %v279 = vadd.f32 %v194, %v278
    %280 = vdwg.mxu0
    %281 = vmatpush.msra.mxu0 0.0
    %282 = vmatpush.msra.mxu0 0.0
    %283 = vmatpush.msra.mxu0 0.0
    %284 = vmatpush.msra.mxu0 0.0
    %v285 = vand.u32 %v139, 4294901760
    %v286 = vsub.f32 %v139, %v285
    %287 = vmatpush.msra.mxu0 %v286
    %v288 = vand.u32 %v138, 4294901760
    %v289 = vsub.f32 %v138, %v288
    %290 = vmatpush.msra.mxu0 %v289
    %v291 = vand.u32 %v137, 4294901760
    %v292 = vsub.f32 %v137, %v291
    %293 = vmatpush.msra.mxu0 %v292
    %v294 = vand.u32 %v136, 4294901760
    %v295 = vsub.f32 %v136, %v294
    %296 = vmatpush.msra.mxu0 %v295
    %v297 = vand.u32 %v135, 4294901760
    %v298 = vsub.f32 %v135, %v297
    %299 = vmatpush.msra.mxu0 %v298
    %v300 = vand.u32 %v134, 4294901760
    %v301 = vsub.f32 %v134, %v300
    %302 = vmatpush.msra.mxu0 %v301
    %v303 = vand.u32 %v133, 4294901760
    %v304 = vsub.f32 %v133, %v303
    %305 = vmatpush.msra.mxu0 %v304
    %v306 = vand.u32 %v132, 4294901760
    %v307 = vsub.f32 %v132, %v306
    %308 = vmatpush.msra.mxu0 %v307
    %v309 = vand.u32 %v131, 4294901760
    %v310 = vsub.f32 %v131, %v309
    %311 = vmatpush.msra.mxu0 %v310
    %v312 = vand.u32 %v130, 4294901760
    %v313 = vsub.f32 %v130, %v312
    %314 = vmatpush.msra.mxu0 %v313
    %v315 = vand.u32 %v129, 4294901760
    %v316 = vsub.f32 %v129, %v315
    %317 = vmatpush.msra.mxu0 %v316
    %v318 = vand.u32 %v128, 4294901760
    %v319 = vsub.f32 %v128, %v318
    %320 = vmatpush.msra.mxu0 %v319
    %v321 = vand.u32 %v146, 4294901760
    %v322 = vsub.f32 %v146, %v321
    %323 = vmatmul.f32.gmra.mxu0 %v322
    %v324 = vpop.f32.mrf.mxu0
    %v325 = vadd.f32 %v275, %v324
    %v326 = vand.u32 %v149, 4294901760
    %v327 = vsub.f32 %v149, %v326
    %328 = vmatmul.f32.gmra.mxu0 %v327
    %v329 = vpop.f32.mrf.mxu0
    %v330 = vadd.f32 %v279, %v329
    %331 = vdwg.mxu0
    %332 = vmatpush.msra.mxu0 0.0
    %333 = vmatpush.msra.mxu0 0.0
    %334 = vmatpush.msra.mxu0 0.0
    %335 = vmatpush.msra.mxu0 0.0
    %v336 = vand.u32 %v139, 4294901760
    %337 = vmatpush.msra.mxu0 %v336
    %v338 = vand.u32 %v138, 4294901760
    %339 = vmatpush.msra.mxu0 %v338
    %v340 = vand.u32 %v137, 4294901760
    %341 = vmatpush.msra.mxu0 %v340
    %v342 = vand.u32 %v136, 4294901760
    %343 = vmatpush.msra.mxu0 %v342
    %v344 = vand.u32 %v135, 4294901760
    %345 = vmatpush.msra.mxu0 %v344
    %v346 = vand.u32 %v134, 4294901760
    %347 = vmatpush.msra.mxu0 %v346
    %v348 = vand.u32 %v133, 4294901760
    %349 = vmatpush.msra.mxu0 %v348
    %v350 = vand.u32 %v132, 4294901760
    %351 = vmatpush.msra.mxu0 %v350
    %v352 = vand.u32 %v131, 4294901760
    %353 = vmatpush.msra.mxu0 %v352
    %v354 = vand.u32 %v130, 4294901760
    %355 = vmatpush.msra.mxu0 %v354
    %v356 = vand.u32 %v129, 4294901760
    %357 = vmatpush.msra.mxu0 %v356
    %v358 = vand.u32 %v128, 4294901760
    %359 = vmatpush.msra.mxu0 %v358
    %v360 = vand.u32 %v146, 4294901760
    %v361 = vsub.f32 %v146, %v360
    %v362 = vand.u32 %v361, 4294901760
    %363 = vmatmul.f32.gmra.mxu0 %v362
    %v364 = vpop.f32.mrf.mxu0
    %v365 = vadd.f32 %v325, %v364
    %v366 = vand.u32 %v149, 4294901760
    %v367 = vsub.f32 %v149, %v366
    %v368 = vand.u32 %v367, 4294901760
    %369 = vmatmul.f32.gmra.mxu0 %v368
    %v370 = vpop.f32.mrf.mxu0
    %v371 = vadd.f32 %v330, %v370
    %372 = vdwg.mxu0
    %373 = vmatpush.msra.mxu0 0.0
    %374 = vmatpush.msra.mxu0 0.0
    %375 = vmatpush.msra.mxu0 0.0
    %376 = vmatpush.msra.mxu0 0.0
    %v377 = vand.u32 %v139, 4294901760
    %v378 = vsub.f32 %v139, %v377
    %v379 = vand.u32 %v378, 4294901760
    %380 = vmatpush.msra.mxu0 %v379
    %v381 = vand.u32 %v138, 4294901760
    %v382 = vsub.f32 %v138, %v381
    %v383 = vand.u32 %v382, 4294901760
    %384 = vmatpush.msra.mxu0 %v383
    %v385 = vand.u32 %v137, 4294901760
    %v386 = vsub.f32 %v137, %v385
    %v387 = vand.u32 %v386, 4294901760
    %388 = vmatpush.msra.mxu0 %v387
    %v389 = vand.u32 %v136, 4294901760
    %v390 = vsub.f32 %v136, %v389
    %v391 = vand.u32 %v390, 4294901760
    %392 = vmatpush.msra.mxu0 %v391
    %v393 = vand.u32 %v135, 4294901760
    %v394 = vsub.f32 %v135, %v393
    %v395 = vand.u32 %v394, 4294901760
    %396 = vmatpush.msra.mxu0 %v395
    %v397 = vand.u32 %v134, 4294901760
    %v398 = vsub.f32 %v134, %v397
    %v399 = vand.u32 %v398, 4294901760
    %400 = vmatpush.msra.mxu0 %v399
    %v401 = vand.u32 %v133, 4294901760
    %v402 = vsub.f32 %v133, %v401
    %v403 = vand.u32 %v402, 4294901760
    %404 = vmatpush.msra.mxu0 %v403
    %v405 = vand.u32 %v132, 4294901760
    %v406 = vsub.f32 %v132, %v405
    %v407 = vand.u32 %v406, 4294901760
    %408 = vmatpush.msra.mxu0 %v407
    %v409 = vand.u32 %v131, 4294901760
    %v410 = vsub.f32 %v131, %v409
    %v411 = vand.u32 %v410, 4294901760
    %412 = vmatpush.msra.mxu0 %v411
    %v413 = vand.u32 %v130, 4294901760
    %v414 = vsub.f32 %v130, %v413
    %v415 = vand.u32 %v414, 4294901760
    %416 = vmatpush.msra.mxu0 %v415
    %v417 = vand.u32 %v129, 4294901760
    %v418 = vsub.f32 %v129, %v417
    %v419 = vand.u32 %v418, 4294901760
    %420 = vmatpush.msra.mxu0 %v419
    %v421 = vand.u32 %v128, 4294901760
    %v422 = vsub.f32 %v128, %v421
    %v423 = vand.u32 %v422, 4294901760
    %424 = vmatpush.msra.mxu0 %v423
    %v425 = vand.u32 %v146, 4294901760
    %426 = vmatmul.f32.gmra.mxu0 %v425
    %v427 = vpop.f32.mrf.mxu0
    %v428 = vadd.f32 %v365, %v427
    %v429 = vand.u32 %v149, 4294901760
    %430 = vmatmul.f32.gmra.mxu0 %v429
    %v431 = vpop.f32.mrf.mxu0
    %v432 = vadd.f32 %v371, %v431
    %433 = vdwg.mxu0
    %434 = vmatpush.msra.mxu0 0.0
    %435 = vmatpush.msra.mxu0 0.0
    %436 = vmatpush.msra.mxu0 0.0
    %437 = vmatpush.msra.mxu0 0.0
    %v438 = vand.u32 %v139, 4294901760
    %439 = vmatpush.msra.mxu0 %v438
    %v440 = vand.u32 %v138, 4294901760
    %441 = vmatpush.msra.mxu0 %v440
    %v442 = vand.u32 %v137, 4294901760
    %443 = vmatpush.msra.mxu0 %v442
    %v444 = vand.u32 %v136, 4294901760
    %445 = vmatpush.msra.mxu0 %v444
    %v446 = vand.u32 %v135, 4294901760
    %447 = vmatpush.msra.mxu0 %v446
    %v448 = vand.u32 %v134, 4294901760
    %449 = vmatpush.msra.mxu0 %v448
    %v450 = vand.u32 %v133, 4294901760
    %451 = vmatpush.msra.mxu0 %v450
    %v452 = vand.u32 %v132, 4294901760
    %453 = vmatpush.msra.mxu0 %v452
    %v454 = vand.u32 %v131, 4294901760
    %455 = vmatpush.msra.mxu0 %v454
    %v456 = vand.u32 %v130, 4294901760
    %457 = vmatpush.msra.mxu0 %v456
    %v458 = vand.u32 %v129, 4294901760
    %459 = vmatpush.msra.mxu0 %v458
    %v460 = vand.u32 %v128, 4294901760
    %461 = vmatpush.msra.mxu0 %v460
    %v462 = vand.u32 %v146, 4294901760
    %463 = vmatmul.f32.gmra.mxu0 %v462
    %v464 = vpop.f32.mrf.mxu0
    %v465 = vadd.f32 %v428, %v464
    %v466 = vand.u32 %v149, 4294901760
    %467 = vmatmul.f32.gmra.mxu0 %v466
    %v468 = vpop.f32.mrf.mxu0
    %v469 = vadd.f32 %v432, %v468
    %470 = vdwg.mxu0
    %v471 = vmax.f32 %v465, 0.0
    %v472 = vmax.f32 %v469, 0.0
    %v473 = vsel %vm122, %v471, -inf
    %v474 = vrot.slane %v473, 4
    %v475 = vmax.f32 %v473, %v474
    %v476 = vrot.slane %v475, 2
    %v477 = vmax.f32 %v475, %v476
    %v478 = vrot.slane %v477, 1
    %v479 = vmax.f32 %v477, %v478
    %v480 = vsel %vm122, %v472, -inf
    %v481 = vrot.slane %v480, 4
    %v482 = vmax.f32 %v480, %v481
    %v483 = vrot.slane %v482, 2
    %v484 = vmax.f32 %v482, %v483
    %v485 = vrot.slane %v484, 1
    %v486 = vmax.f32 %v484, %v485
    %v487 = vsel %vm52, %v479, %v486
    %v488 = vld [vmem:[%s3] sm:$0xff]
    %v489 = vld [vmem:[%s3 + $0x8] sm:$0xff]
    %v490 = vld [vmem:[%s3 + $0x10] sm:$0xff]
    %v491 = vld [vmem:[%s3 + $0x18] sm:$0xff]
    %v492 = vld [vmem:[%s4] sm:$0x1]
    %v494 = vperm.slane %v492, 0
    %v497 = vsel %vm122, %v487, 0
    %499 = vmatpush.msra.mxu0 0.0
    %500 = vmatpush.msra.mxu0 0.0
    %501 = vmatpush.msra.mxu0 0.0
    %502 = vmatpush.msra.mxu0 0.0
    %503 = vmatpush.msra.mxu0 0.0
    %504 = vmatpush.msra.mxu0 0.0
    %505 = vmatpush.msra.mxu0 0.0
    %506 = vmatpush.msra.mxu0 0.0
    %507 = vmatpush.msra.mxu0 0.0
    %508 = vmatpush.msra.mxu0 0.0
    %509 = vmatpush.msra.mxu0 0.0
    %510 = vmatpush.msra.mxu0 0.0
    %v511 = vand.u32 %v491, 4294901760
    %512 = vmatpush.msra.mxu0 %v511
    %v513 = vand.u32 %v490, 4294901760
    %514 = vmatpush.msra.mxu0 %v513
    %v515 = vand.u32 %v489, 4294901760
    %516 = vmatpush.msra.mxu0 %v515
    %v517 = vand.u32 %v488, 4294901760
    %518 = vmatpush.msra.mxu0 %v517
    %v519 = vand.u32 %v497, 4294901760
    %v520 = vsub.f32 %v497, %v519
    %v521 = vand.u32 %v520, 4294901760
    %v522 = vsub.f32 %v520, %v521
    %v523 = vand.u32 %v522, 4294901760
    %524 = vmatmul.f32.gmra.mxu0 %v523
    %v525 = vpop.f32.mrf.mxu0
    %v526 = vadd.f32 %v494, %v525
    %527 = vdwg.mxu0
    %528 = vmatpush.msra.mxu0 0.0
    %529 = vmatpush.msra.mxu0 0.0
    %530 = vmatpush.msra.mxu0 0.0
    %531 = vmatpush.msra.mxu0 0.0
    %532 = vmatpush.msra.mxu0 0.0
    %533 = vmatpush.msra.mxu0 0.0
    %534 = vmatpush.msra.mxu0 0.0
    %535 = vmatpush.msra.mxu0 0.0
    %536 = vmatpush.msra.mxu0 0.0
    %537 = vmatpush.msra.mxu0 0.0
    %538 = vmatpush.msra.mxu0 0.0
    %539 = vmatpush.msra.mxu0 0.0
    %v540 = vand.u32 %v491, 4294901760
    %v541 = vsub.f32 %v491, %v540
    %v542 = vand.u32 %v541, 4294901760
    %v543 = vsub.f32 %v541, %v542
    %v544 = vand.u32 %v543, 4294901760
    %545 = vmatpush.msra.mxu0 %v544
    %v546 = vand.u32 %v490, 4294901760
    %v547 = vsub.f32 %v490, %v546
    %v548 = vand.u32 %v547, 4294901760
    %v549 = vsub.f32 %v547, %v548
    %v550 = vand.u32 %v549, 4294901760
    %551 = vmatpush.msra.mxu0 %v550
    %v552 = vand.u32 %v489, 4294901760
    %v553 = vsub.f32 %v489, %v552
    %v554 = vand.u32 %v553, 4294901760
    %v555 = vsub.f32 %v553, %v554
    %v556 = vand.u32 %v555, 4294901760
    %557 = vmatpush.msra.mxu0 %v556
    %v558 = vand.u32 %v488, 4294901760
    %v559 = vsub.f32 %v488, %v558
    %v560 = vand.u32 %v559, 4294901760
    %v561 = vsub.f32 %v559, %v560
    %v562 = vand.u32 %v561, 4294901760
    %563 = vmatpush.msra.mxu0 %v562
    %v564 = vand.u32 %v497, 4294901760
    %565 = vmatmul.f32.gmra.mxu0 %v564
    %v566 = vpop.f32.mrf.mxu0
    %v567 = vadd.f32 %v526, %v566
    %568 = vdwg.mxu0
    %569 = vmatpush.msra.mxu0 0.0
    %570 = vmatpush.msra.mxu0 0.0
    %571 = vmatpush.msra.mxu0 0.0
    %572 = vmatpush.msra.mxu0 0.0
    %573 = vmatpush.msra.mxu0 0.0
    %574 = vmatpush.msra.mxu0 0.0
    %575 = vmatpush.msra.mxu0 0.0
    %576 = vmatpush.msra.mxu0 0.0
    %577 = vmatpush.msra.mxu0 0.0
    %578 = vmatpush.msra.mxu0 0.0
    %579 = vmatpush.msra.mxu0 0.0
    %580 = vmatpush.msra.mxu0 0.0
    %v581 = vand.u32 %v491, 4294901760
    %v582 = vsub.f32 %v491, %v581
    %583 = vmatpush.msra.mxu0 %v582
    %v584 = vand.u32 %v490, 4294901760
    %v585 = vsub.f32 %v490, %v584
    %586 = vmatpush.msra.mxu0 %v585
    %v587 = vand.u32 %v489, 4294901760
    %v588 = vsub.f32 %v489, %v587
    %589 = vmatpush.msra.mxu0 %v588
    %v590 = vand.u32 %v488, 4294901760
    %v591 = vsub.f32 %v488, %v590
    %592 = vmatpush.msra.mxu0 %v591
    %v593 = vand.u32 %v497, 4294901760
    %v594 = vsub.f32 %v497, %v593
    %595 = vmatmul.f32.gmra.mxu0 %v594
    %v596 = vpop.f32.mrf.mxu0
    %v597 = vadd.f32 %v567, %v596
    %598 = vdwg.mxu0
    %599 = vmatpush.msra.mxu0 0.0
    %600 = vmatpush.msra.mxu0 0.0
    %601 = vmatpush.msra.mxu0 0.0
    %602 = vmatpush.msra.mxu0 0.0
    %603 = vmatpush.msra.mxu0 0.0
    %604 = vmatpush.msra.mxu0 0.0
    %605 = vmatpush.msra.mxu0 0.0
    %606 = vmatpush.msra.mxu0 0.0
    %607 = vmatpush.msra.mxu0 0.0
    %608 = vmatpush.msra.mxu0 0.0
    %609 = vmatpush.msra.mxu0 0.0
    %610 = vmatpush.msra.mxu0 0.0
    %v611 = vand.u32 %v491, 4294901760
    %612 = vmatpush.msra.mxu0 %v611
    %v613 = vand.u32 %v490, 4294901760
    %614 = vmatpush.msra.mxu0 %v613
    %v615 = vand.u32 %v489, 4294901760
    %616 = vmatpush.msra.mxu0 %v615
    %v617 = vand.u32 %v488, 4294901760
    %618 = vmatpush.msra.mxu0 %v617
    %v619 = vand.u32 %v497, 4294901760
    %v620 = vsub.f32 %v497, %v619
    %v621 = vand.u32 %v620, 4294901760
    %622 = vmatmul.f32.gmra.mxu0 %v621
    %v623 = vpop.f32.mrf.mxu0
    %v624 = vadd.f32 %v597, %v623
    %625 = vdwg.mxu0
    %626 = vmatpush.msra.mxu0 0.0
    %627 = vmatpush.msra.mxu0 0.0
    %628 = vmatpush.msra.mxu0 0.0
    %629 = vmatpush.msra.mxu0 0.0
    %630 = vmatpush.msra.mxu0 0.0
    %631 = vmatpush.msra.mxu0 0.0
    %632 = vmatpush.msra.mxu0 0.0
    %633 = vmatpush.msra.mxu0 0.0
    %634 = vmatpush.msra.mxu0 0.0
    %635 = vmatpush.msra.mxu0 0.0
    %636 = vmatpush.msra.mxu0 0.0
    %637 = vmatpush.msra.mxu0 0.0
    %v638 = vand.u32 %v491, 4294901760
    %v639 = vsub.f32 %v491, %v638
    %v640 = vand.u32 %v639, 4294901760
    %641 = vmatpush.msra.mxu0 %v640
    %v642 = vand.u32 %v490, 4294901760
    %v643 = vsub.f32 %v490, %v642
    %v644 = vand.u32 %v643, 4294901760
    %645 = vmatpush.msra.mxu0 %v644
    %v646 = vand.u32 %v489, 4294901760
    %v647 = vsub.f32 %v489, %v646
    %v648 = vand.u32 %v647, 4294901760
    %649 = vmatpush.msra.mxu0 %v648
    %v650 = vand.u32 %v488, 4294901760
    %v651 = vsub.f32 %v488, %v650
    %v652 = vand.u32 %v651, 4294901760
    %653 = vmatpush.msra.mxu0 %v652
    %v654 = vand.u32 %v497, 4294901760
    %655 = vmatmul.f32.gmra.mxu0 %v654
    %v656 = vpop.f32.mrf.mxu0
    %v657 = vadd.f32 %v624, %v656
    %658 = vdwg.mxu0
    %659 = vmatpush.msra.mxu0 0.0
    %660 = vmatpush.msra.mxu0 0.0
    %661 = vmatpush.msra.mxu0 0.0
    %662 = vmatpush.msra.mxu0 0.0
    %663 = vmatpush.msra.mxu0 0.0
    %664 = vmatpush.msra.mxu0 0.0
    %665 = vmatpush.msra.mxu0 0.0
    %666 = vmatpush.msra.mxu0 0.0
    %667 = vmatpush.msra.mxu0 0.0
    %668 = vmatpush.msra.mxu0 0.0
    %669 = vmatpush.msra.mxu0 0.0
    %670 = vmatpush.msra.mxu0 0.0
    %v671 = vand.u32 %v491, 4294901760
    %672 = vmatpush.msra.mxu0 %v671
    %v673 = vand.u32 %v490, 4294901760
    %674 = vmatpush.msra.mxu0 %v673
    %v675 = vand.u32 %v489, 4294901760
    %676 = vmatpush.msra.mxu0 %v675
    %v677 = vand.u32 %v488, 4294901760
    %678 = vmatpush.msra.mxu0 %v677
    %v679 = vand.u32 %v497, 4294901760
    %680 = vmatmul.f32.gmra.mxu0 %v679
    %v681 = vpop.f32.mrf.mxu0
    %v682 = vadd.f32 %v657, %v681
    %683 = vdwg.mxu0
    %vm684 = vcmask 9216
    %685 = vst.msk [vmem:[#allocation2] sm:$0x3] %vm684, %v682
    // Predicated region
    $region22: #{sentiment_cnn_forward.1} parent=1 // pred_check
      _
    $region23: #{sentiment_cnn_forward.1} parent=1 // pred_check_branch
      %687 = sbr.rel (0) target = $region25
    $region24: #{sentiment_cnn_forward.1} parent=1 // pred_region
      %689 = vsyncadd [#allocation3], 0
      %s691 = sshll.u32 [#allocation2], 4
      %s692 = int_to_ptr.vmem [resolvable:$true] %s691
      %s693 = sshll.u32 %s5, 4
      %s694 = int_to_ptr.hbm [resolvable:$true] %s693
      %696 = dma.vmem_to_hbm [thread:$0]  %s692, 32, %s694, [#allocation3]
    $region25: #{sentiment_cnn_forward.1} parent=1 // pred_fallthru
      _
    // Predicated region
    $region26: #{sentiment_cnn_forward.1} parent=1 // pred_check
      _
    $region27: #{sentiment_cnn_forward.1} parent=1 // pred_check_branch
      %698 = sbr.rel (0) target = $region29
    $region28: #{sentiment_cnn_forward.1} parent=1 // pred_region
      %700 = dma.done [#allocation3], 32
    $region29: #{sentiment_cnn_forward.1} parent=1 // pred_fallthru
      _
    %701 = vsyncpa [#allocation3], 1

</llo_original>
